<compile_context>
chip_gen: v5e
topology: v5e:2x2
jax: 0.10.0
libtpu: 0.0.40
codegen_flags: <defaults>
</compile_context>

<pallas_src>
import jax
import jax.numpy as jnp
from jax.experimental import pallas as pl
from jax.experimental.pallas import tpu as pltpu

INPUT_DIM = 20
H1 = 128
H2 = 64
OUTPUT_DIM = 3


def _round_up(x, m):
    return ((x + m - 1) // m) * m


def _mlp_kernel(x_ref,
                w1_ref, b1_ref,
                w2_ref, b2_ref,
                w3_ref, b3_ref,
                o_ref):
    """Whole 3-layer MLP, feature-major, fused into one invocation per batch tile.

    x_ref: (INPUT_DIM, bt) f32   -> cast to bf16 in-kernel.
    w*_ref: bf16 transposed weights (out_dim, in_dim); b*_ref: f32 (out_dim, 1).
    o_ref: (OUTPUT_DIM, bt) lane-dense output tile.
    Accumulation, bias add and ReLU are f32.
    """
    x = x_ref[...].astype(jnp.bfloat16)                       # (20, bt) bf16

    # ---- Layer 1: Linear(20 -> 128) with BN folded in, + ReLU --------------
    h = jnp.dot(w1_ref[...], x, preferred_element_type=jnp.float32)   # (128, bt) f32
    h = jnp.maximum(h + b1_ref[...], 0.0)
    # Dropout(0.3): identity in eval mode.

    # ---- Layer 2: Linear(128 -> 64) with BN folded in, + ReLU --------------
    h = jnp.dot(w2_ref[...], h.astype(jnp.bfloat16),
                preferred_element_type=jnp.float32)                   # (64, bt) f32
    h = jnp.maximum(h + b2_ref[...], 0.0)
    # Dropout(0.3): identity in eval mode.

    # ---- Layer 3: Linear(64 -> 3) -------------------------------------------
    out = jnp.dot(w3_ref[...], h.astype(jnp.bfloat16),
                  preferred_element_type=jnp.float32)                 # (3, bt) f32
    o_ref[...] = (out + b3_ref[...]).astype(o_ref.dtype)


def tuned_mlp_forward(x, folded_params, *, batch_tile=2048,
                      x_is_feature_major=False, core_parallel=False,
                      out_dtype=jnp.float32):
    """Eval-mode TunedMLP forward.

    x: [N, INPUT_DIM] f32 (or, with x_is_feature_major=True, [INPUT_DIM, N] —
       preferred, avoids the wrapper transpose pass over x).
    Returns [N, OUTPUT_DIM].

    batch_tile: sweep in {1024, 2048, 4096}; must be a multiple of 128 (batch is
    the lane dimension of every block). core_parallel=True splits the batch grid
    axis across TensorCores (useful on v7x; keep grid length >= 2).
    """
    (w1t, b1, w2t, b2, w3t, b3) = folded_params
    assert batch_tile % 128 == 0, "batch_tile must be a multiple of 128 (lanes)"

    if not x_is_feature_major:
        x = x.T                                   # (N, 20) -> (20, N)
    assert x.shape[0] == INPUT_DIM
    n = x.shape[1]

    # Clamp the tile for tiny batches; keep it a multiple of 128 so all blocks
    # stay lane-aligned.  Ragged tail (n % bt != 0) is handled by a partial last
    # block: OOB columns are garbage-in/garbage-out and their writes are dropped.
    bt = min(batch_tile, _round_up(max(n, 1), 128))
    grid = (pl.cdiv(n, bt),)

    # Parameters are small: full block, constant block index across the grid
    # (Pallas skips the re-DMA when the block index is unchanged step-to-step).
    def const_spec(shape):
        return pl.BlockSpec(shape, lambda i: (0, 0))

    if core_parallel:
        dims = (pltpu.CORE_PARALLEL,)             # explicit 2-TC split on v7x
    else:
        dims = ("parallel",)

    out_fm = pl.pallas_call(
        _mlp_kernel,
        out_shape=jax.ShapeDtypeStruct((OUTPUT_DIM, n), out_dtype),
        grid_spec=pltpu.PrefetchScalarGridSpec(
            num_scalar_prefetch=0,
            grid=grid,
            in_specs=[
                pl.BlockSpec((INPUT_DIM, bt), lambda i: (0, i)),   # x tile (20, bt)
                const_spec(w1t.shape), const_spec(b1.shape),
                const_spec(w2t.shape), const_spec(b2.shape),
                const_spec(w3t.shape), const_spec(b3.shape),
            ],
            out_specs=pl.BlockSpec((OUTPUT_DIM, bt), lambda i: (0, i)),
        ),
        compiler_params=pltpu.CompilerParams(
            dimension_semantics=dims,
            # Explicit limit so large batch tiles also fit v5e's 16 MiB default
            # scoped VMEM; footprint at bt=4096 is still only ~8 MiB.
            vmem_limit_bytes=32 * 1024 * 1024),
    )(x, w1t, b1, w2t, b2, w3t, b3)

    return out_fm.T                               # (OUTPUT_DIM, n) -> (n, OUTPUT_DIM)


def init_params(key):
    """Deterministic synthetic parameters matching TunedMLP's shapes.

    Linear weights stored as [in_dim, out_dim] (transposed vs PyTorch).
    """
    eps = 1e-5
    ks = jax.random.split(key, 12)

    def linear(kw, kb, fan_in, fan_out):
        bound = 1.0 / jnp.sqrt(fan_in)
        w = jax.random.uniform(kw, (fan_in, fan_out), jnp.float32, -bound, bound)
        b = jax.random.uniform(kb, (1, fan_out), jnp.float32, -bound, bound)
        return w, b

    def batchnorm(kg, kb, km, kv, dim):
        gamma = 1.0 + 0.1 * jax.random.normal(kg, (1, dim), jnp.float32)
        beta = 0.1 * jax.random.normal(kb, (1, dim), jnp.float32)
        running_mean = 0.1 * jax.random.normal(km, (1, dim), jnp.float32)
        running_var = jnp.abs(1.0 + 0.1 * jax.random.normal(kv, (1, dim), jnp.float32))
        scale = gamma / jnp.sqrt(running_var + eps)
        shift = beta - running_mean * scale
        return scale, shift

    w1, b1 = linear(ks[0], ks[1], INPUT_DIM, H1)
    s1, t1 = batchnorm(ks[2], ks[3], ks[4], ks[5], H1)
    w2, b2 = linear(ks[6], ks[7], H1, H2)
    s2, t2 = batchnorm(ks[8], ks[9], ks[10], ks[11], H2)
    w3, b3 = linear(jax.random.fold_in(key, 100), jax.random.fold_in(key, 101),
                    H2, OUTPUT_DIM)
    return (w1, b1, s1, t1, w2, b2, s2, t2, w3, b3)


def fold_params(raw_params):
    """Host-side one-time fold of BatchNorm (eval) into the Linear weights,
    stored transposed (feature-major) for the W @ x^T kernel.

    W' = (W * s)^T  -> (out_dim, in_dim) bf16 (MXU operand),
    b' = (b * s + t)^T -> (out_dim, 1) f32 (added to the f32 accumulator).
    """
    (w1, b1, s1, t1, w2, b2, s2, t2, w3, b3) = raw_params
    w1t = (w1 * s1).T.astype(jnp.bfloat16)            # (128, 20)
    b1f = (b1 * s1 + t1).T.astype(jnp.float32)        # (128, 1)
    w2t = (w2 * s2).T.astype(jnp.bfloat16)            # (64, 128)
    b2f = (b2 * s2 + t2).T.astype(jnp.float32)        # (64, 1)
    w3t = w3.T.astype(jnp.bfloat16)                   # (3, 64)
    b3f = b3.T.astype(jnp.float32)                    # (3, 1)
    return (w1t, b1f, w2t, b2f, w3t, b3f)


def reference_forward(x, raw_params):
    """Pure f32 reference of the eval-mode module (row-major, untransposed)."""
    (w1, b1, s1, t1, w2, b2, s2, t2, w3, b3) = raw_params
    h = jnp.maximum((x @ w1 + b1) * s1 + t1, 0.0)
    h = jnp.maximum((h @ w2 + b2) * s2 + t2, 0.0)
    return h @ w3 + b3


if __name__ == "__main__":
    key = jax.random.PRNGKey(0)
    k_x, k_p = jax.random.split(key)

    raw_params = init_params(k_p)
    folded = fold_params(raw_params)

    # Test 1: multi-step grid with a ragged tail.
    # N=300, batch_tile=128 -> grid of 3 steps, last block has 44 valid columns
    # (OOB columns garbage-in/garbage-out, writes dropped).
    N1 = 300
    x1 = jax.random.normal(k_x, (N1, INPUT_DIM), jnp.float32)
    out1 = jax.block_until_ready(tuned_mlp_forward(x1, folded, batch_tile=128))
    ref1 = reference_forward(x1, raw_params)
    assert out1.shape == (N1, OUTPUT_DIM)
    # bf16 MXU operands (f32 accumulation) vs f32 reference -> loosened tolerance.
    assert jnp.allclose(out1, ref1, atol=3e-2, rtol=3e-2), (
        f"test1 max abs err {jnp.max(jnp.abs(out1 - ref1))}")

    # Test 2: tiny batch, feature-major input (no wrapper transpose of x),
    # default batch_tile clamped to a single partial 128-wide block.
    N2 = 40
    x2 = jax.random.normal(jax.random.fold_in(k_x, 1), (N2, INPUT_DIM), jnp.float32)
    out2 = jax.block_until_ready(
        tuned_mlp_forward(x2.T, folded, x_is_feature_major=True))
    ref2 = reference_forward(x2, raw_params)
    assert out2.shape == (N2, OUTPUT_DIM)
    assert jnp.allclose(out2, ref2, atol=3e-2, rtol=3e-2), (
        f"test2 max abs err {jnp.max(jnp.abs(out2 - ref2))}")

    print("KERNEL_OK")
</pallas_src>

<mosaic_0001>
module attributes {stable_mosaic.version = 11 : i64} {
  func.func @_mlp_kernel(%arg0: i32, %arg1: memref<20x128xf32, #tpu.memory_space<vmem>>, %arg2: memref<128x20xbf16, #tpu.memory_space<vmem>>, %arg3: memref<128x1xf32, #tpu.memory_space<vmem>>, %arg4: memref<64x128xbf16, #tpu.memory_space<vmem>>, %arg5: memref<64x1xf32, #tpu.memory_space<vmem>>, %arg6: memref<3x64xbf16, #tpu.memory_space<vmem>>, %arg7: memref<3x1xf32, #tpu.memory_space<vmem>>, %arg8: memref<3x128xf32, #tpu.memory_space<vmem>>) attributes {dimension_semantics = [#tpu.dimension_semantics<parallel>], iteration_bounds = array<i64: 3>, scalar_prefetch = 0 : i64, scratch_operands = 0 : i64, tpu.core_type = #tpu.core_type<tc>, window_params = [{transform_indices = @transform_0, window_bounds = array<i64: 20, 128>}, {pipeline_mode = #tpu.pipeline_mode<synchronous>, transform_indices = @transform_1, window_bounds = array<i64: 128, 20>}, {pipeline_mode = #tpu.pipeline_mode<synchronous>, transform_indices = @transform_2, window_bounds = array<i64: 128, 1>}, {pipeline_mode = #tpu.pipeline_mode<synchronous>, transform_indices = @transform_3, window_bounds = array<i64: 64, 128>}, {pipeline_mode = #tpu.pipeline_mode<synchronous>, transform_indices = @transform_4, window_bounds = array<i64: 64, 1>}, {pipeline_mode = #tpu.pipeline_mode<synchronous>, transform_indices = @transform_5, window_bounds = array<i64: 3, 64>}, {pipeline_mode = #tpu.pipeline_mode<synchronous>, transform_indices = @transform_6, window_bounds = array<i64: 3, 1>}, {transform_indices = @transform_7, window_bounds = array<i64: 3, 128>}]} {
    %c0 = arith.constant 0 : index
    %c0_0 = arith.constant 0 : index
    %0 = vector.load %arg1[%c0, %c0_0] : memref<20x128xf32, #tpu.memory_space<vmem>>, vector<20x128xf32>
    %1 = arith.truncf %0 : vector<20x128xf32> to vector<20x128xbf16>
    %c0_1 = arith.constant 0 : index
    %c0_2 = arith.constant 0 : index
    %2 = vector.load %arg2[%c0_1, %c0_2] : memref<128x20xbf16, #tpu.memory_space<vmem>>, vector<128x20xbf16>
    %cst = arith.constant dense<0.000000e+00> : vector<128x128xf32>
    %3 = tpu.matmul %2, %1, %cst {dimension_numbers = #tpu.dot_dimension_numbers<[1], [0], [0], [1], [0, 0, 1, 1], [], []>} : vector<128x20xbf16>, vector<20x128xbf16>, vector<128x128xf32> -> vector<128x128xf32>
    %c0_3 = arith.constant 0 : index
    %c0_4 = arith.constant 0 : index
    %4 = vector.load %arg3[%c0_3, %c0_4] : memref<128x1xf32, #tpu.memory_space<vmem>>, vector<128x1xf32>
    %5 = vector.broadcast %4 : vector<128x1xf32> to vector<128x128xf32>
    %6 = arith.addf %3, %5 : vector<128x128xf32>
    %cst_5 = arith.constant 0.000000e+00 : f32
    %7 = vector.broadcast %cst_5 : f32 to vector<128x128xf32>
    %8 = arith.maximumf %6, %7 : vector<128x128xf32>
    %c0_6 = arith.constant 0 : index
    %c0_7 = arith.constant 0 : index
    %9 = vector.load %arg4[%c0_6, %c0_7] : memref<64x128xbf16, #tpu.memory_space<vmem>>, vector<64x128xbf16>
    %10 = arith.truncf %8 : vector<128x128xf32> to vector<128x128xbf16>
    %cst_8 = arith.constant dense<0.000000e+00> : vector<64x128xf32>
    %11 = tpu.matmul %9, %10, %cst_8 {dimension_numbers = #tpu.dot_dimension_numbers<[1], [0], [0], [1], [0, 0, 1, 1], [], []>} : vector<64x128xbf16>, vector<128x128xbf16>, vector<64x128xf32> -> vector<64x128xf32>
    %c0_9 = arith.constant 0 : index
    %c0_10 = arith.constant 0 : index
    %12 = vector.load %arg5[%c0_9, %c0_10] : memref<64x1xf32, #tpu.memory_space<vmem>>, vector<64x1xf32>
    %13 = vector.broadcast %12 : vector<64x1xf32> to vector<64x128xf32>
    %14 = arith.addf %11, %13 : vector<64x128xf32>
    %cst_11 = arith.constant 0.000000e+00 : f32
    %15 = vector.broadcast %cst_11 : f32 to vector<64x128xf32>
    %16 = arith.maximumf %14, %15 : vector<64x128xf32>
    %c0_12 = arith.constant 0 : index
    %c0_13 = arith.constant 0 : index
    %17 = vector.load %arg6[%c0_12, %c0_13] : memref<3x64xbf16, #tpu.memory_space<vmem>>, vector<3x64xbf16>
    %18 = arith.truncf %16 : vector<64x128xf32> to vector<64x128xbf16>
    %cst_14 = arith.constant dense<0.000000e+00> : vector<3x128xf32>
    %19 = tpu.matmul %17, %18, %cst_14 {dimension_numbers = #tpu.dot_dimension_numbers<[1], [0], [0], [1], [0, 0, 1, 1], [], []>} : vector<3x64xbf16>, vector<64x128xbf16>, vector<3x128xf32> -> vector<3x128xf32>
    %c0_15 = arith.constant 0 : index
    %c0_16 = arith.constant 0 : index
    %20 = vector.load %arg7[%c0_15, %c0_16] : memref<3x1xf32, #tpu.memory_space<vmem>>, vector<3x1xf32>
    %21 = vector.broadcast %20 : vector<3x1xf32> to vector<3x128xf32>
    %22 = arith.addf %19, %21 : vector<3x128xf32>
    %c0_17 = arith.constant 0 : index
    %c0_18 = arith.constant 0 : index
    %23 = vector.load %arg8[%c0_17, %c0_18] : memref<3x128xf32, #tpu.memory_space<vmem>>, vector<3x128xf32>
    tpu.vector_store %arg8[%c0_17, %c0_18], %22 {strides = array<i32>} : memref<3x128xf32, #tpu.memory_space<vmem>>, vector<3x128xf32>,
    return
  }
  func.func @transform_0(%arg0: i32) -> (i32, i32) {
    %c0_i32 = arith.constant 0 : i32
    %c0_i32_0 = arith.constant 0 : i32
    return %c0_i32, %arg0 : i32, i32
  }
  func.func @transform_1(%arg0: i32) -> (i32, i32) {
    %c0_i32 = arith.constant 0 : i32
    %c0_i32_0 = arith.constant 0 : i32
    %c0_i32_1 = arith.constant 0 : i32
    return %c0_i32, %c0_i32_0 : i32, i32
  }
  func.func @transform_2(%arg0: i32) -> (i32, i32) {
    %c0_i32 = arith.constant 0 : i32
    %c0_i32_0 = arith.constant 0 : i32
    %c0_i32_1 = arith.constant 0 : i32
    return %c0_i32, %c0_i32_0 : i32, i32
  }
  func.func @transform_3(%arg0: i32) -> (i32, i32) {
    %c0_i32 = arith.constant 0 : i32
    %c0_i32_0 = arith.constant 0 : i32
    %c0_i32_1 = arith.constant 0 : i32
    return %c0_i32, %c0_i32_0 : i32, i32
  }
  func.func @transform_4(%arg0: i32) -> (i32, i32) {
    %c0_i32 = arith.constant 0 : i32
    %c0_i32_0 = arith.constant 0 : i32
    %c0_i32_1 = arith.constant 0 : i32
    return %c0_i32, %c0_i32_0 : i32, i32
  }
  func.func @transform_5(%arg0: i32) -> (i32, i32) {
    %c0_i32 = arith.constant 0 : i32
    %c0_i32_0 = arith.constant 0 : i32
    %c0_i32_1 = arith.constant 0 : i32
    return %c0_i32, %c0_i32_0 : i32, i32
  }
  func.func @transform_6(%arg0: i32) -> (i32, i32) {
    %c0_i32 = arith.constant 0 : i32
    %c0_i32_0 = arith.constant 0 : i32
    %c0_i32_1 = arith.constant 0 : i32
    return %c0_i32, %c0_i32_0 : i32, i32
  }
  func.func @transform_7(%arg0: i32) -> (i32, i32) {
    %c0_i32 = arith.constant 0 : i32
    %c0_i32_0 = arith.constant 0 : i32
    return %c0_i32, %arg0 : i32, i32
  }
}

</mosaic_0001>

<llo_original>
// kernel: tpu_custom_call.1
$region0: #{tpu_custom_call.1}
  #allocation0 [shape = 'u32[]', space=smem, size = 0x4, offset = 0x4, fixed_abs, tag = 'smem constant byte address 0x4 - core index']
  #allocation1 [shape = 'u32[72,128]{1,0:T(1,128)}', space=vmem, size = 0x9000, scoped, tag = 'internal scratch']
  %s0 = inlined_call_operand.vmem [shape: f32[20,300], index: 0, kind: input, shape index: {}]
  %s1 = inlined_call_operand.vmem [shape: bf16[128,20], index: 1, kind: input, shape index: {}]
  %s2 = inlined_call_operand.vmem [shape: f32[128,1], index: 2, kind: input, shape index: {}]
  %s3 = inlined_call_operand.vmem [shape: bf16[64,128], index: 3, kind: input, shape index: {}]
  %s4 = inlined_call_operand.vmem [shape: f32[64,1], index: 4, kind: input, shape index: {}]
  %s5 = inlined_call_operand.vmem [shape: bf16[3,64], index: 5, kind: input, shape index: {}]
  %s6 = inlined_call_operand.vmem [shape: f32[3,1], index: 6, kind: input, shape index: {}]
  %s7 = inlined_call_operand.hbm [shape: f32[3,300], index: 7, kind: output, shape index: {}]
  %s8 = sld [smem:[#allocation0]]
  $region99: #{tpu_custom_call.1} parent=0
    _
  %s10 = ssub.s32 1, %s8
  %s11 = scalar_select 0, %s10, %s8
  $region1: #{tpu_custom_call.1} parent=0
    #allocation2 [shape = 'u8[24576]{0}', space=vmem, size = 0x6000, scoped, tag = 'input window, operand 0']
    #allocation3 [shape = 'u8[4096]{0}', space=vmem, size = 0x1000, scoped, tag = 'output window, operand 0']
    #allocation4 [shape = 's32[2]{0}', space=sflag, size = 0x8, scoped, tag = 'scoped memory for tpu_custom_call.1']
    %12 = vsyncpa [#allocation4], 0
    %s13 = scalar_lea.sflag [#allocation4], 1
    %14 = vsyncpa %s13, 0
    loop: start=0, step=1, limit=5
    $region2: #{tpu_custom_call.1} parent=1 // loop_pre_header
      _
    $region3: #{tpu_custom_call.1} parent=1 // loop_header
      %s16 = sphi 0, %s20
      %p17 = scmp.ge.s32.totalorder %s16, 5
      %s26 = sphi 0, %s28
      %s29 = sphi 0, %s26
      %s30 = sphi 0, %s29
      %s46 = sphi 0, %s30
      %s50 = sphi 0, %s50
      %s52 = sphi 0, %s50
      %s53 = sphi 0, %s52
      %s67 = sphi 0, %s53
      %s71 = sphi 0, %s71
      %s73 = sphi 0, %s71
      %s74 = sphi 0, %s73
      %s88 = sphi 0, %s74
      %s92 = sphi 0, %s92
      %s94 = sphi 0, %s92
      %s95 = sphi 0, %s94
      %s109 = sphi 0, %s95
      %s113 = sphi 0, %s113
      %s115 = sphi 0, %s113
      %s116 = sphi 0, %s115
      %s130 = sphi 0, %s116
      %s134 = sphi 0, %s134
      %s136 = sphi 0, %s134
      %s137 = sphi 0, %s136
      %s151 = sphi 0, %s137
      %s155 = sphi 0, %s155
      %s157 = sphi 0, %s155
      %s158 = sphi 0, %s157
      %s172 = sphi 0, %s158
      %s178 = sphi 0, %s180
      %s181 = sphi 0, %s178
      %s182 = sphi 0, %s181
      %s198 = sphi 0, %s182
    $region4: #{tpu_custom_call.1} parent=1 // loop_header_branch
      %19 = sbr.rel (%p17) target = $region8
    $region5: #{tpu_custom_call.1} parent=1 // loop_body
      %s21 = ssub.s32 %s16, 1
      %s22 = ssub.s32 %s16, 2
      %s23 = sadd.s32 %s16, 1
      %s24 = ssub.s32 %s16, %s23
      %p25 = scmp.eq.s32.totalorder %s24, 0
      %s27 = sadd.s32 %s26, 1
      %s28 = scalar_select %p25, %s26, %s27
      %p31 = pneg %p25
      %p32 = scmp.eq.s32.totalorder %s16, 2
      %p33 = por %p31, %p32
      %p34 = scmp.ne.s32.totalorder %s26, %s29
      %p35 = scmp.eq.s32.totalorder %s16, 0
      %p36 = por %p34, %p35
      %p37 = scmp.ne.s32.totalorder %s26, %s29
      %p38 = scmp.eq.s32.totalorder %s21, 2
      %p39 = por %p37, %p38
      %p40 = scmp.ne.s32.totalorder %s29, %s30
      %p41 = scmp.eq.s32.totalorder %s21, 0
      %p42 = por %p40, %p41
      %p43 = scmp.ne.s32.totalorder %s29, %s30
      %p44 = scmp.eq.s32.totalorder %s22, 2
      %p45 = por %p43, %p44
      %p47 = scmp.ne.s32.totalorder %s30, %s46
      %p48 = scmp.eq.s32.totalorder %s22, 0
      %p49 = por %p47, %p48
      %s51 = sadd.s32 %s50, 1
      %p54 = scmp.eq.s32.totalorder %s16, 2
      %p55 = scmp.ne.s32.totalorder %s50, %s52
      %p56 = scmp.eq.s32.totalorder %s16, 0
      %p57 = por %p55, %p56
      %p58 = scmp.ne.s32.totalorder %s50, %s52
      %p59 = scmp.eq.s32.totalorder %s21, 2
      %p60 = por %p58, %p59
      %p61 = scmp.ne.s32.totalorder %s52, %s53
      %p62 = scmp.eq.s32.totalorder %s21, 0
      %p63 = por %p61, %p62
      %p64 = scmp.ne.s32.totalorder %s52, %s53
      %p65 = scmp.eq.s32.totalorder %s22, 2
      %p66 = por %p64, %p65
      %p68 = scmp.ne.s32.totalorder %s53, %s67
      %p69 = scmp.eq.s32.totalorder %s22, 0
      %p70 = por %p68, %p69
      %s72 = sadd.s32 %s71, 1
      %p75 = scmp.eq.s32.totalorder %s16, 2
      %p76 = scmp.ne.s32.totalorder %s71, %s73
      %p77 = scmp.eq.s32.totalorder %s16, 0
      %p78 = por %p76, %p77
      %p79 = scmp.ne.s32.totalorder %s71, %s73
      %p80 = scmp.eq.s32.totalorder %s21, 2
      %p81 = por %p79, %p80
      %p82 = scmp.ne.s32.totalorder %s73, %s74
      %p83 = scmp.eq.s32.totalorder %s21, 0
      %p84 = por %p82, %p83
      %p85 = scmp.ne.s32.totalorder %s73, %s74
      %p86 = scmp.eq.s32.totalorder %s22, 2
      %p87 = por %p85, %p86
      %p89 = scmp.ne.s32.totalorder %s74, %s88
      %p90 = scmp.eq.s32.totalorder %s22, 0
      %p91 = por %p89, %p90
      %s93 = sadd.s32 %s92, 1
      %p96 = scmp.eq.s32.totalorder %s16, 2
      %p97 = scmp.ne.s32.totalorder %s92, %s94
      %p98 = scmp.eq.s32.totalorder %s16, 0
      %p99 = por %p97, %p98
      %p100 = scmp.ne.s32.totalorder %s92, %s94
      %p101 = scmp.eq.s32.totalorder %s21, 2
      %p102 = por %p100, %p101
      %p103 = scmp.ne.s32.totalorder %s94, %s95
      %p104 = scmp.eq.s32.totalorder %s21, 0
      %p105 = por %p103, %p104
      %p106 = scmp.ne.s32.totalorder %s94, %s95
      %p107 = scmp.eq.s32.totalorder %s22, 2
      %p108 = por %p106, %p107
      %p110 = scmp.ne.s32.totalorder %s95, %s109
      %p111 = scmp.eq.s32.totalorder %s22, 0
      %p112 = por %p110, %p111
      %s114 = sadd.s32 %s113, 1
      %p117 = scmp.eq.s32.totalorder %s16, 2
      %p118 = scmp.ne.s32.totalorder %s113, %s115
      %p119 = scmp.eq.s32.totalorder %s16, 0
      %p120 = por %p118, %p119
      %p121 = scmp.ne.s32.totalorder %s113, %s115
      %p122 = scmp.eq.s32.totalorder %s21, 2
      %p123 = por %p121, %p122
      %p124 = scmp.ne.s32.totalorder %s115, %s116
      %p125 = scmp.eq.s32.totalorder %s21, 0
      %p126 = por %p124, %p125
      %p127 = scmp.ne.s32.totalorder %s115, %s116
      %p128 = scmp.eq.s32.totalorder %s22, 2
      %p129 = por %p127, %p128
      %p131 = scmp.ne.s32.totalorder %s116, %s130
      %p132 = scmp.eq.s32.totalorder %s22, 0
      %p133 = por %p131, %p132
      %s135 = sadd.s32 %s134, 1
      %p138 = scmp.eq.s32.totalorder %s16, 2
      %p139 = scmp.ne.s32.totalorder %s134, %s136
      %p140 = scmp.eq.s32.totalorder %s16, 0
      %p141 = por %p139, %p140
      %p142 = scmp.ne.s32.totalorder %s134, %s136
      %p143 = scmp.eq.s32.totalorder %s21, 2
      %p144 = por %p142, %p143
      %p145 = scmp.ne.s32.totalorder %s136, %s137
      %p146 = scmp.eq.s32.totalorder %s21, 0
      %p147 = por %p145, %p146
      %p148 = scmp.ne.s32.totalorder %s136, %s137
      %p149 = scmp.eq.s32.totalorder %s22, 2
      %p150 = por %p148, %p149
      %p152 = scmp.ne.s32.totalorder %s137, %s151
      %p153 = scmp.eq.s32.totalorder %s22, 0
      %p154 = por %p152, %p153
      %s156 = sadd.s32 %s155, 1
      %p159 = scmp.eq.s32.totalorder %s16, 2
      %p160 = scmp.ne.s32.totalorder %s155, %s157
      %p161 = scmp.eq.s32.totalorder %s16, 0
      %p162 = por %p160, %p161
      %p163 = scmp.ne.s32.totalorder %s155, %s157
      %p164 = scmp.eq.s32.totalorder %s21, 2
      %p165 = por %p163, %p164
      %p166 = scmp.ne.s32.totalorder %s157, %s158
      %p167 = scmp.eq.s32.totalorder %s21, 0
      %p168 = por %p166, %p167
      %p169 = scmp.ne.s32.totalorder %s157, %s158
      %p170 = scmp.eq.s32.totalorder %s22, 2
      %p171 = por %p169, %p170
      %p173 = scmp.ne.s32.totalorder %s158, %s172
      %p174 = scmp.eq.s32.totalorder %s22, 0
      %p175 = por %p173, %p174
      %s176 = ssub.s32 %s16, %s23
      %p177 = scmp.eq.s32.totalorder %s176, 0
      %s179 = sadd.s32 %s178, 1
      %s180 = scalar_select %p177, %s178, %s179
      %p183 = pneg %p177
      %p184 = scmp.eq.s32.totalorder %s16, 2
      %p185 = por %p183, %p184
      %p186 = scmp.ne.s32.totalorder %s178, %s181
      %p187 = scmp.eq.s32.totalorder %s16, 0
      %p188 = por %p186, %p187
      %p189 = scmp.ne.s32.totalorder %s178, %s181
      %p190 = scmp.eq.s32.totalorder %s21, 2
      %p191 = por %p189, %p190
      %p192 = scmp.ne.s32.totalorder %s181, %s182
      %p193 = scmp.eq.s32.totalorder %s21, 0
      %p194 = por %p192, %p193
      %p195 = scmp.ne.s32.totalorder %s181, %s182
      %p196 = scmp.eq.s32.totalorder %s22, 2
      %p197 = por %p195, %p196
      %p199 = scmp.ne.s32.totalorder %s182, %s198
      %p200 = scmp.eq.s32.totalorder %s22, 0
      %p201 = por %p199, %p200
      %p202 = scmp.le.s32.totalorder 1, %s16
      %p203 = scmp.lt.s32.totalorder %s16, 4
      %p204 = pnand %p202, %p203
      %p205 = pneg %p204
      // Predicated region
      $region9: #{tpu_custom_call.1} parent=5 // pred_check
        _
      $region10: #{tpu_custom_call.1} parent=5 // pred_check_branch
        %207 = sbr.rel (%p204) target = $region12
      $region11: #{tpu_custom_call.1} parent=5 // pred_region
        %s208 = ssub.s32 %s16, 1
        // Predicated region
        $region13: #{tpu_custom_call.1} parent=11 // pred_check
          %p209 = pneg %p63
        $region14: #{tpu_custom_call.1} parent=11 // pred_check_branch
          %211 = sbr.rel (%p209) target = $region16
        $region15: #{tpu_custom_call.1} parent=11 // pred_region
          _
        $region16: #{tpu_custom_call.1} parent=11 // pred_fallthru
          _
        // Predicated region
        $region17: #{tpu_custom_call.1} parent=11 // pred_check
          %p212 = pneg %p84
        $region18: #{tpu_custom_call.1} parent=11 // pred_check_branch
          %214 = sbr.rel (%p212) target = $region20
        $region19: #{tpu_custom_call.1} parent=11 // pred_region
          _
        $region20: #{tpu_custom_call.1} parent=11 // pred_fallthru
          _
        // Predicated region
        $region21: #{tpu_custom_call.1} parent=11 // pred_check
          %p215 = pneg %p105
        $region22: #{tpu_custom_call.1} parent=11 // pred_check_branch
          %217 = sbr.rel (%p215) target = $region24
        $region23: #{tpu_custom_call.1} parent=11 // pred_region
          _
        $region24: #{tpu_custom_call.1} parent=11 // pred_fallthru
          _
        // Predicated region
        $region25: #{tpu_custom_call.1} parent=11 // pred_check
          %p218 = pneg %p126
        $region26: #{tpu_custom_call.1} parent=11 // pred_check_branch
          %220 = sbr.rel (%p218) target = $region28
        $region27: #{tpu_custom_call.1} parent=11 // pred_region
          _
        $region28: #{tpu_custom_call.1} parent=11 // pred_fallthru
          _
        // Predicated region
        $region29: #{tpu_custom_call.1} parent=11 // pred_check
          %p221 = pneg %p147
        $region30: #{tpu_custom_call.1} parent=11 // pred_check_branch
          %223 = sbr.rel (%p221) target = $region32
        $region31: #{tpu_custom_call.1} parent=11 // pred_region
          _
        $region32: #{tpu_custom_call.1} parent=11 // pred_fallthru
          _
        // Predicated region
        $region33: #{tpu_custom_call.1} parent=11 // pred_check
          %p224 = pneg %p168
        $region34: #{tpu_custom_call.1} parent=11 // pred_check_branch
          %226 = sbr.rel (%p224) target = $region36
        $region35: #{tpu_custom_call.1} parent=11 // pred_region
          _
        $region36: #{tpu_custom_call.1} parent=11 // pred_fallthru
          _
      $region12: #{tpu_custom_call.1} parent=5 // pred_fallthru
        _
      %p227 = scmp.lt.s32.totalorder %s16, 3
      // Predicated region
      $region37: #{tpu_custom_call.1} parent=5 // pred_check
        %p228 = pneg %p227
      $region38: #{tpu_custom_call.1} parent=5 // pred_check_branch
        %230 = sbr.rel (%p228) target = $region40
      $region39: #{tpu_custom_call.1} parent=5 // pred_region
        // Predicated region
        $region41: #{tpu_custom_call.1} parent=39 // pred_check
          %p231 = pneg %p36
        $region42: #{tpu_custom_call.1} parent=39 // pred_check_branch
          %233 = sbr.rel (%p231) target = $region44
        $region43: #{tpu_custom_call.1} parent=39 // pred_region
          %s234 = sand.u32 %s26, 1
          %s235 = sand.u32 %s26, 1
          %s236 = smul.addr %s235, 24
          %s237 = scalar_lea.vmem [#allocation2], %s236
          %s238 = smul.addr %s16, 8
          %s239 = scalar_lea.vmem %s0, %s238
          // Predicated region
          $region45: #{tpu_custom_call.1} parent=43 // pred_check
            _
          $region46: #{tpu_custom_call.1} parent=43 // pred_check_branch
            %241 = sbr.rel (0) target = $region48
          $region47: #{tpu_custom_call.1} parent=43 // pred_region
            // Predicated region
            $region49: #{tpu_custom_call.1} parent=47 // pred_check
              _
            $region50: #{tpu_custom_call.1} parent=47 // pred_check_branch
              %243 = sbr.rel (0) target = $region52
            $region51: #{tpu_custom_call.1} parent=47 // pred_region
              // Predicated region
              $region64: #{tpu_custom_call.1} parent=51 // pred_check
                _
              $region65: #{tpu_custom_call.1} parent=51 // pred_check_branch
                %263 = sbr.rel (0) target = $region67
              $region66: #{tpu_custom_call.1} parent=51 // pred_region
                loop: start=0, step=1, limit=1
                $region68: #{tpu_custom_call.1} parent=66 // loop_pre_header
                  _
                $region69: #{tpu_custom_call.1} parent=66 // loop_header
                  %s265 = sphi 0, %s269
                  %p266 = scmp.ge.s32.totalorder %s265, 1
                  %s270 = sphi %s239, %s239
                  %s271 = sphi %s237, %s237
                $region70: #{tpu_custom_call.1} parent=66 // loop_header_branch
                  %268 = sbr.rel (%p266) target = $region74
                $region71: #{tpu_custom_call.1} parent=66 // loop_body
                  %v272 = vld [vmem:[%s270] sm:$0xff]
                  %273 = vst [vmem:[%s271] sm:$0xff] %v272
                  %v274 = vld [vmem:[%s270 + $0x18] sm:$0xff]
                  %275 = vst [vmem:[%s271 + $0x8] sm:$0xff] %v274
                  %v276 = vld [vmem:[%s270 + $0x30] sm:$0xff]
                  %277 = vst [vmem:[%s271 + $0x10] sm:$0xff] %v276
                $region72: #{tpu_custom_call.1} parent=66 // loop_footer
                  %s269 = sadd.s32 1, %s265
                $region73: #{tpu_custom_call.1} parent=66 // loop_footer_branch
                  %264 = sbr.rel target = $region69
                $region74: #{tpu_custom_call.1} parent=66 // loop_exit
                  _
              $region67: #{tpu_custom_call.1} parent=51 // pred_fallthru
                _
              // Predicated region
              $region75: #{tpu_custom_call.1} parent=51 // pred_check
                _
              $region76: #{tpu_custom_call.1} parent=51 // pred_check_branch
                %279 = sbr.rel target = $region78
              $region77: #{tpu_custom_call.1} parent=51 // pred_region
                _
              $region78: #{tpu_custom_call.1} parent=51 // pred_fallthru
                _
            $region52: #{tpu_custom_call.1} parent=47 // pred_fallthru
              _
            // Predicated region
            $region53: #{tpu_custom_call.1} parent=47 // pred_check
              _
            $region54: #{tpu_custom_call.1} parent=47 // pred_check_branch
              %245 = sbr.rel target = $region56
            $region55: #{tpu_custom_call.1} parent=47 // pred_region
              %s247 = ssub.s32 256, 1
              loop: start=0, step=1, limit=1
              $region57: #{tpu_custom_call.1} parent=55 // loop_pre_header
                _
              $region58: #{tpu_custom_call.1} parent=55 // loop_header
                %s249 = sphi 0, %s253
                %p250 = scmp.ge.s32.totalorder %s249, 1
                %s254 = sphi %s239, %s239
                %s255 = sphi %s237, %s237
              $region59: #{tpu_custom_call.1} parent=55 // loop_header_branch
                %252 = sbr.rel (%p250) target = $region63
              $region60: #{tpu_custom_call.1} parent=55 // loop_body
                %v256 = vld [vmem:[%s254] sm:%s247]
                %257 = vst [vmem:[%s255] sm:%s247] %v256
                %v258 = vld [vmem:[%s254 + $0x18] sm:%s247]
                %259 = vst [vmem:[%s255 + $0x8] sm:%s247] %v258
                %v260 = vld [vmem:[%s254 + $0x30] sm:%s247]
                %261 = vst [vmem:[%s255 + $0x10] sm:%s247] %v260
              $region61: #{tpu_custom_call.1} parent=55 // loop_footer
                %s253 = sadd.s32 1, %s249
              $region62: #{tpu_custom_call.1} parent=55 // loop_footer_branch
                %248 = sbr.rel target = $region58
              $region63: #{tpu_custom_call.1} parent=55 // loop_exit
                _
            $region56: #{tpu_custom_call.1} parent=47 // pred_fallthru
              _
          $region48: #{tpu_custom_call.1} parent=43 // pred_fallthru
            _
          %280 = vnop
        $region44: #{tpu_custom_call.1} parent=39 // pred_fallthru
          _
      $region40: #{tpu_custom_call.1} parent=5 // pred_fallthru
        _
      %p281 = scmp.le.s32.totalorder 1, %s16
      %p282 = scmp.lt.s32.totalorder %s16, 4
      %p283 = pnand %p281, %p282
      %p284 = pneg %p283
      // Predicated region
      $region79: #{tpu_custom_call.1} parent=5 // pred_check
        _
      $region80: #{tpu_custom_call.1} parent=5 // pred_check_branch
        %286 = sbr.rel (%p283) target = $region82
      $region81: #{tpu_custom_call.1} parent=5 // pred_region
        %s287 = ssub.s32 %s16, 1
        %s288 = sand.u32 %s29, 1
        %s289 = sand.u32 %s29, 1
        %s290 = smul.addr %s289, 24
        %s291 = scalar_lea.vmem [#allocation2], %s290
        // Predicated region
        $region83: #{tpu_custom_call.1} parent=81 // pred_check
          %p292 = pneg %p42
        $region84: #{tpu_custom_call.1} parent=81 // pred_check_branch
          %294 = sbr.rel (%p292) target = $region86
        $region85: #{tpu_custom_call.1} parent=81 // pred_region
          _
        $region86: #{tpu_custom_call.1} parent=81 // pred_fallthru
          _
        %s295 = sand.u32 %s29, 1
        %s296 = sand.u32 %s29, 1
        %s297 = smul.addr %s296, 24
        %s298 = scalar_lea.vmem [#allocation2], %s297
        %p299 = pneg %p42
        %p300 = pneg %p39
        %p301 = pneg %p63
        %p302 = pneg %p60
        %p303 = pneg %p84
        %p304 = pneg %p81
        %p305 = pneg %p105
        %p306 = pneg %p102
        %p307 = pneg %p126
        %p308 = pneg %p123
        %p309 = pneg %p147
        %p310 = pneg %p144
        %p311 = pneg %p168
        %p312 = pneg %p165
        %p313 = pneg %p194
        %p314 = pneg %p191
        %s315 = sand.u32 %s181, 1
        %s316 = scalar_lea.sflag [#allocation4], %s315
        %s317 = sand.u32 %s181, 1
        %s318 = smul.addr %s317, 4
        %s319 = scalar_lea.vmem [#allocation3], %s318
        %v321 = vld [vmem:[%s291] sm:$0xff]
        %v322 = vld [vmem:[%s291 + $0x8] sm:$0xff]
        %v323 = vld [vmem:[%s291 + $0x10] sm:$0xf]
        %v324 = vpack.c.bf16 %v322, %v321
        %v325 = vpack.c.bf16 %v323, %v323
        %v326 = vld [vmem:[%s1] sm:$0xf]
        %v327 = vld [vmem:[%s1 + $0x4] sm:$0xf]
        %v328 = vld [vmem:[%s1 + $0x8] sm:$0xf]
        %v329 = vld [vmem:[%s1 + $0xc] sm:$0xf]
        %v330 = vld [vmem:[%s1 + $0x10] sm:$0xf]
        %v331 = vld [vmem:[%s1 + $0x14] sm:$0xf]
        %v332 = vld [vmem:[%s1 + $0x18] sm:$0xf]
        %v333 = vld [vmem:[%s1 + $0x1c] sm:$0xf]
        %v334 = vld [vmem:[%s1 + $0x20] sm:$0xf]
        %v335 = vld [vmem:[%s1 + $0x24] sm:$0xf]
        %v336 = vld [vmem:[%s1 + $0x28] sm:$0xf]
        %v337 = vld [vmem:[%s1 + $0x2c] sm:$0xf]
        %v338 = vld [vmem:[%s1 + $0x30] sm:$0xf]
        %v339 = vld [vmem:[%s1 + $0x34] sm:$0xf]
        %v340 = vld [vmem:[%s1 + $0x38] sm:$0xf]
        %v341 = vld [vmem:[%s1 + $0x3c] sm:$0xf]
        %v342 = vld [vmem:[%s2] sm:$0xff]
        %v343 = vld [vmem:[%s2 + $0x8] sm:$0xff]
        %v344 = vld [vmem:[%s2 + $0x10] sm:$0xff]
        %v345 = vld [vmem:[%s2 + $0x18] sm:$0xff]
        %v346 = vld [vmem:[%s2 + $0x20] sm:$0xff]
        %v347 = vld [vmem:[%s2 + $0x28] sm:$0xff]
        %v348 = vld [vmem:[%s2 + $0x30] sm:$0xff]
        %v349 = vld [vmem:[%s2 + $0x38] sm:$0xff]
        %v350 = vld [vmem:[%s2 + $0x40] sm:$0xff]
        %v351 = vld [vmem:[%s2 + $0x48] sm:$0xff]
        %v352 = vld [vmem:[%s2 + $0x50] sm:$0xff]
        %v353 = vld [vmem:[%s2 + $0x58] sm:$0xff]
        %v354 = vld [vmem:[%s2 + $0x60] sm:$0xff]
        %v355 = vld [vmem:[%s2 + $0x68] sm:$0xff]
        %v356 = vld [vmem:[%s2 + $0x70] sm:$0xff]
        %v357 = vld [vmem:[%s2 + $0x78] sm:$0xff]
        %359 = vset.pattern.permute.xlu0 0
        %360 = vperm.xlu0 %359, %v342
        %v361 = vpop.permute.xlu0 %360
        %364 = vset.pattern.permute.xlu0 0
        %365 = vperm.xlu0 %364, %v343
        %v366 = vpop.permute.xlu0 %365
        %369 = vset.pattern.permute.xlu0 0
        %370 = vperm.xlu0 %369, %v344
        %v371 = vpop.permute.xlu0 %370
        %374 = vset.pattern.permute.xlu0 0
        %375 = vperm.xlu0 %374, %v345
        %v376 = vpop.permute.xlu0 %375
        %379 = vset.pattern.permute.xlu0 0
        %380 = vperm.xlu0 %379, %v346
        %v381 = vpop.permute.xlu0 %380
        %384 = vset.pattern.permute.xlu0 0
        %385 = vperm.xlu0 %384, %v347
        %v386 = vpop.permute.xlu0 %385
        %389 = vset.pattern.permute.xlu0 0
        %390 = vperm.xlu0 %389, %v348
        %v391 = vpop.permute.xlu0 %390
        %394 = vset.pattern.permute.xlu0 0
        %395 = vperm.xlu0 %394, %v349
        %v396 = vpop.permute.xlu0 %395
        %399 = vset.pattern.permute.xlu0 0
        %400 = vperm.xlu0 %399, %v350
        %v401 = vpop.permute.xlu0 %400
        %404 = vset.pattern.permute.xlu0 0
        %405 = vperm.xlu0 %404, %v351
        %v406 = vpop.permute.xlu0 %405
        %409 = vset.pattern.permute.xlu0 0
        %410 = vperm.xlu0 %409, %v352
        %v411 = vpop.permute.xlu0 %410
        %414 = vset.pattern.permute.xlu0 0
        %415 = vperm.xlu0 %414, %v353
        %v416 = vpop.permute.xlu0 %415
        %419 = vset.pattern.permute.xlu0 0
        %420 = vperm.xlu0 %419, %v354
        %v421 = vpop.permute.xlu0 %420
        %424 = vset.pattern.permute.xlu0 0
        %425 = vperm.xlu0 %424, %v355
        %v426 = vpop.permute.xlu0 %425
        %429 = vset.pattern.permute.xlu0 0
        %430 = vperm.xlu0 %429, %v356
        %v431 = vpop.permute.xlu0 %430
        %434 = vset.pattern.permute.xlu0 0
        %435 = vperm.xlu0 %434, %v357
        %v436 = vpop.permute.xlu0 %435
        %v454 = vunpack.c.l.b16 %v326
        %v455 = vunpack.c.l.b16 %v327
        %v456 = vunpack.c.l.b16 %v328
        %v457 = vunpack.c.l.b16 %v329
        %v458 = vunpack.c.l.b16 %v330
        %v459 = vunpack.c.l.b16 %v331
        %v460 = vunpack.c.l.b16 %v332
        %v461 = vunpack.c.l.b16 %v333
        %v462 = vunpack.c.l.b16 %v334
        %v463 = vunpack.c.l.b16 %v335
        %v464 = vunpack.c.l.b16 %v336
        %v465 = vunpack.c.l.b16 %v337
        %v466 = vunpack.c.l.b16 %v338
        %v467 = vunpack.c.l.b16 %v339
        %v468 = vunpack.c.l.b16 %v340
        %v469 = vunpack.c.l.b16 %v341
        %v470 = vpack.c.b16 %v455, %v454
        %v471 = vpack.c.b16 %v457, %v456
        %v472 = vpack.c.b16 %v459, %v458
        %v473 = vpack.c.b16 %v461, %v460
        %v474 = vpack.c.b16 %v463, %v462
        %v475 = vpack.c.b16 %v465, %v464
        %v476 = vpack.c.b16 %v467, %v466
        %v477 = vpack.c.b16 %v469, %v468
        %vm478 = vcmask 162816
        %v480 = vsel %vm478, %v470, 0
        %v483 = vsel %vm478, %v471, 0
        %v486 = vsel %vm478, %v472, 0
        %v489 = vsel %vm478, %v473, 0
        %v492 = vsel %vm478, %v474, 0
        %v495 = vsel %vm478, %v475, 0
        %v498 = vsel %vm478, %v476, 0
        %v501 = vsel %vm478, %v477, 0
        %vm503 = vcmask 1041408
        %v505 = vsel %vm503, %v325, 0
        %507 = vmatpush.bf16.msra.mxu0 0
        %508 = vmatpush.bf16.msra.mxu0 0
        %509 = vmatpush.bf16.msra.mxu0 0
        %510 = vmatpush.bf16.msra.mxu0 0
        %511 = vmatpush.bf16.msra.mxu0 0
        %512 = vmatpush.bf16.msra.mxu0 0
        %513 = vmatpush.bf16.msra.mxu0 %v505
        %514 = vmatpush.bf16.msra.mxu0 %v324
        %515 = vmatmul.bf16.gmra.mxu0 %v480
        %v516 = vpop.f32.mrf.mxu0
        %v517 = vadd.f32 %v361, %v516
        %v518 = vpop.f32.mrf.mxu0
        %v519 = vadd.f32 %v366, %v518
        %520 = vmatmul.bf16.gmra.mxu0 %v483
        %v521 = vpop.f32.mrf.mxu0
        %v522 = vadd.f32 %v371, %v521
        %v523 = vpop.f32.mrf.mxu0
        %v524 = vadd.f32 %v376, %v523
        %525 = vmatmul.bf16.gmra.mxu0 %v486
        %v526 = vpop.f32.mrf.mxu0
        %v527 = vadd.f32 %v381, %v526
        %v528 = vpop.f32.mrf.mxu0
        %v529 = vadd.f32 %v386, %v528
        %530 = vmatmul.bf16.gmra.mxu0 %v489
        %v531 = vpop.f32.mrf.mxu0
        %v532 = vadd.f32 %v391, %v531
        %v533 = vpop.f32.mrf.mxu0
        %v534 = vadd.f32 %v396, %v533
        %535 = vmatmul.bf16.gmra.mxu0 %v492
        %v536 = vpop.f32.mrf.mxu0
        %v537 = vadd.f32 %v401, %v536
        %v538 = vpop.f32.mrf.mxu0
        %v539 = vadd.f32 %v406, %v538
        %540 = vmatmul.bf16.gmra.mxu0 %v495
        %v541 = vpop.f32.mrf.mxu0
        %v542 = vadd.f32 %v411, %v541
        %v543 = vpop.f32.mrf.mxu0
        %v544 = vadd.f32 %v416, %v543
        %545 = vmatmul.bf16.gmra.mxu0 %v498
        %v546 = vpop.f32.mrf.mxu0
        %v547 = vadd.f32 %v421, %v546
        %v548 = vpop.f32.mrf.mxu0
        %v549 = vadd.f32 %v426, %v548
        %550 = vmatmul.bf16.gmra.mxu0 %v501
        %v551 = vpop.f32.mrf.mxu0
        %v552 = vadd.f32 %v431, %v551
        %v553 = vpop.f32.mrf.mxu0
        %v554 = vadd.f32 %v436, %v553
        %555 = vdwg.mxu0
        %v556 = vmax.f32 %v517, 0.0
        %v557 = vmax.f32 %v519, 0.0
        %v558 = vmax.f32 %v522, 0.0
        %v559 = vmax.f32 %v524, 0.0
        %v560 = vmax.f32 %v527, 0.0
        %v561 = vmax.f32 %v529, 0.0
        %v562 = vmax.f32 %v532, 0.0
        %v563 = vmax.f32 %v534, 0.0
        %v564 = vmax.f32 %v537, 0.0
        %v565 = vmax.f32 %v539, 0.0
        %v566 = vmax.f32 %v542, 0.0
        %v567 = vmax.f32 %v544, 0.0
        %v568 = vmax.f32 %v547, 0.0
        %v569 = vmax.f32 %v549, 0.0
        %v570 = vmax.f32 %v552, 0.0
        %v571 = vmax.f32 %v554, 0.0
        %v572 = vld [vmem:[%s3] sm:$0xf]
        %v573 = vld [vmem:[%s3 + $0x4] sm:$0xf]
        %v574 = vld [vmem:[%s3 + $0x8] sm:$0xf]
        %v575 = vld [vmem:[%s3 + $0xc] sm:$0xf]
        %v576 = vld [vmem:[%s3 + $0x10] sm:$0xf]
        %v577 = vld [vmem:[%s3 + $0x14] sm:$0xf]
        %v578 = vld [vmem:[%s3 + $0x18] sm:$0xf]
        %v579 = vld [vmem:[%s3 + $0x1c] sm:$0xf]
        %v580 = vpack.c.bf16 %v557, %v556
        %v581 = vpack.c.bf16 %v559, %v558
        %v582 = vpack.c.bf16 %v561, %v560
        %v583 = vpack.c.bf16 %v563, %v562
        %v584 = vpack.c.bf16 %v565, %v564
        %v585 = vpack.c.bf16 %v567, %v566
        %v586 = vpack.c.bf16 %v569, %v568
        %v587 = vpack.c.bf16 %v571, %v570
        %v588 = vld [vmem:[%s4] sm:$0xff]
        %v589 = vld [vmem:[%s4 + $0x8] sm:$0xff]
        %v590 = vld [vmem:[%s4 + $0x10] sm:$0xff]
        %v591 = vld [vmem:[%s4 + $0x18] sm:$0xff]
        %v592 = vld [vmem:[%s4 + $0x20] sm:$0xff]
        %v593 = vld [vmem:[%s4 + $0x28] sm:$0xff]
        %v594 = vld [vmem:[%s4 + $0x30] sm:$0xff]
        %v595 = vld [vmem:[%s4 + $0x38] sm:$0xff]
        %597 = vset.pattern.permute.xlu0 0
        %598 = vperm.xlu0 %597, %v588
        %v599 = vpop.permute.xlu0 %598
        %602 = vset.pattern.permute.xlu0 0
        %603 = vperm.xlu0 %602, %v589
        %v604 = vpop.permute.xlu0 %603
        %607 = vset.pattern.permute.xlu0 0
        %608 = vperm.xlu0 %607, %v590
        %v609 = vpop.permute.xlu0 %608
        %612 = vset.pattern.permute.xlu0 0
        %613 = vperm.xlu0 %612, %v591
        %v614 = vpop.permute.xlu0 %613
        %617 = vset.pattern.permute.xlu0 0
        %618 = vperm.xlu0 %617, %v592
        %v619 = vpop.permute.xlu0 %618
        %622 = vset.pattern.permute.xlu0 0
        %623 = vperm.xlu0 %622, %v593
        %v624 = vpop.permute.xlu0 %623
        %627 = vset.pattern.permute.xlu0 0
        %628 = vperm.xlu0 %627, %v594
        %v629 = vpop.permute.xlu0 %628
        %632 = vset.pattern.permute.xlu0 0
        %633 = vperm.xlu0 %632, %v595
        %v634 = vpop.permute.xlu0 %633
        %v644 = vunpack.c.l.b16 %v572
        %v645 = vunpack.c.l.b16 %v573
        %v646 = vunpack.c.l.b16 %v574
        %v647 = vunpack.c.l.b16 %v575
        %v648 = vunpack.c.l.b16 %v576
        %v649 = vunpack.c.l.b16 %v577
        %v650 = vunpack.c.l.b16 %v578
        %v651 = vunpack.c.l.b16 %v579
        %v652 = vpack.c.b16 %v645, %v644
        %v653 = vpack.c.b16 %v647, %v646
        %v654 = vpack.c.b16 %v649, %v648
        %v655 = vpack.c.b16 %v651, %v650
        %660 = vmatpush.bf16.msra.mxu0 %v587
        %661 = vmatpush.bf16.msra.mxu0 %v586
        %662 = vmatpush.bf16.msra.mxu0 %v585
        %663 = vmatpush.bf16.msra.mxu0 %v584
        %664 = vmatpush.bf16.msra.mxu0 %v583
        %665 = vmatpush.bf16.msra.mxu0 %v582
        %666 = vmatpush.bf16.msra.mxu0 %v581
        %667 = vmatpush.bf16.msra.mxu0 %v580
        %668 = vmatmul.bf16.gmra.mxu0 %v652
        %v669 = vpop.f32.mrf.mxu0
        %v670 = vadd.f32 %v599, %v669
        %v671 = vpop.f32.mrf.mxu0
        %v672 = vadd.f32 %v604, %v671
        %673 = vmatmul.bf16.gmra.mxu0 %v653
        %v674 = vpop.f32.mrf.mxu0
        %v675 = vadd.f32 %v609, %v674
        %v676 = vpop.f32.mrf.mxu0
        %v677 = vadd.f32 %v614, %v676
        %678 = vmatmul.bf16.gmra.mxu0 %v654
        %v679 = vpop.f32.mrf.mxu0
        %v680 = vadd.f32 %v619, %v679
        %v681 = vpop.f32.mrf.mxu0
        %v682 = vadd.f32 %v624, %v681
        %683 = vmatmul.bf16.gmra.mxu0 %v655
        %v684 = vpop.f32.mrf.mxu0
        %v685 = vadd.f32 %v629, %v684
        %v686 = vpop.f32.mrf.mxu0
        %v687 = vadd.f32 %v634, %v686
        %688 = vdwg.mxu0
        %v689 = vmax.f32 %v670, 0.0
        %v690 = vmax.f32 %v672, 0.0
        %v691 = vmax.f32 %v675, 0.0
        %v692 = vmax.f32 %v677, 0.0
        %v693 = vmax.f32 %v680, 0.0
        %v694 = vmax.f32 %v682, 0.0
        %v695 = vmax.f32 %v685, 0.0
        %v696 = vmax.f32 %v687, 0.0
        %v697 = vld [vmem:[%s5] sm:$0x3]
        %v698 = vpack.c.bf16 %v690, %v689
        %v699 = vpack.c.bf16 %v692, %v691
        %v700 = vpack.c.bf16 %v694, %v693
        %v701 = vpack.c.bf16 %v696, %v695
        %v702 = vld [vmem:[%s6] sm:$0x7]
        %704 = vset.pattern.permute.xlu0 0
        %705 = vperm.xlu0 %704, %v702
        %v706 = vpop.permute.xlu0 %705
        %vm708 = vcmask 523264
        %v710 = vsel %vm708, %v697, 0
        %712 = vmatpush.bf16.msra.mxu0 0
        %713 = vmatpush.bf16.msra.mxu0 0
        %714 = vmatpush.bf16.msra.mxu0 0
        %715 = vmatpush.bf16.msra.mxu0 0
        %716 = vmatpush.bf16.msra.mxu0 %v701
        %717 = vmatpush.bf16.msra.mxu0 %v700
        %718 = vmatpush.bf16.msra.mxu0 %v699
        %719 = vmatpush.bf16.msra.mxu0 %v698
        %720 = vmatmul.bf16.gmra.mxu0 %v710
        %v721 = vpop.f32.mrf.mxu0
        %v722 = vadd.f32 %v706, %v721
        %v723 = vpop.f32.mrf.mxu0
        %724 = vdwg.mxu0
        %725 = vst [vmem:[%s319] sm:$0x7] %v722
        %s726 = sand.u32 %s181, 1
        %s727 = scalar_lea.sflag [#allocation4], %s726
        %s728 = sand.u32 %s181, 1
        %s729 = smul.addr %s728, 4
        %s730 = scalar_lea.vmem [#allocation3], %s729
        // Predicated region
        $region87: #{tpu_custom_call.1} parent=81 // pred_check
          %p731 = pneg %p191
        $region88: #{tpu_custom_call.1} parent=81 // pred_check_branch
          %733 = sbr.rel (%p731) target = $region90
        $region89: #{tpu_custom_call.1} parent=81 // pred_region
          %735 = vsyncadd %s727, 0
          %s736 = smul.addr %s21, 4
          %s737 = scalar_lea.hbm %s7, %s736
          %s739 = sshll.u32 %s730, 4
          %s740 = int_to_ptr.vmem [resolvable:$true] %s739
          %s741 = sshll.u32 %s737, 4
          %s742 = int_to_ptr.hbm [resolvable:$true] %s741
          %744 = dma.vmem_to_hbm [thread:$0]  %s740, 64, %s742, %s727
        $region90: #{tpu_custom_call.1} parent=81 // pred_fallthru
          _
      $region82: #{tpu_custom_call.1} parent=5 // pred_fallthru
        _
      %p745 = scmp.le.s32.totalorder 2, %s16
      // Predicated region
      $region91: #{tpu_custom_call.1} parent=5 // pred_check
        %p746 = pneg %p745
      $region92: #{tpu_custom_call.1} parent=5 // pred_check_branch
        %748 = sbr.rel (%p746) target = $region94
      $region93: #{tpu_custom_call.1} parent=5 // pred_region
        %s749 = ssub.s32 %s16, 2
        // Predicated region
        $region95: #{tpu_custom_call.1} parent=93 // pred_check
          %p750 = pneg %p197
        $region96: #{tpu_custom_call.1} parent=93 // pred_check_branch
          %752 = sbr.rel (%p750) target = $region98
        $region97: #{tpu_custom_call.1} parent=93 // pred_region
          %s753 = sand.u32 %s182, 1
          %s754 = scalar_lea.sflag [#allocation4], %s753
          %s755 = sand.u32 %s182, 1
          %s756 = smul.addr %s755, 4
          %s757 = scalar_lea.vmem [#allocation3], %s756
          %759 = dma.done %s754, 64
        $region98: #{tpu_custom_call.1} parent=93 // pred_fallthru
          _
      $region94: #{tpu_custom_call.1} parent=5 // pred_fallthru
        _
    $region6: #{tpu_custom_call.1} parent=1 // loop_footer
      %s20 = sadd.s32 1, %s16
    $region7: #{tpu_custom_call.1} parent=1 // loop_footer_branch
      %15 = sbr.rel target = $region3
    $region8: #{tpu_custom_call.1} parent=1 // loop_exit
      _
    %760 = vsyncpa [#allocation4], 1
    %s761 = scalar_lea.sflag [#allocation4], 1
    %762 = vsyncpa %s761, 1

</llo_original>
